<compile_context>
chip_gen: v7x
topology: tpu7x:2x2x1
jax: 0.10.0
libtpu: 0.0.40
codegen_flags: <defaults>
</compile_context>

<pallas_src>
import jax
import jax.numpy as jnp
from jax.experimental import pallas as pl
from jax.experimental.pallas import tpu as pltpu

N_OPS = 4  # params_shape = (N_OPS,) -> arch param alpha


def _make_mixed_op_kernel(compute_dtype):
    def mixed_op_kernel(w_ref, x_ref, o_ref):
        # w_ref: SMEM (N_OPS,) f32 -- softmax(alpha) weights (scalar prefetch)
        # x_ref/o_ref: (TM, K) lane-dense tiles of the flattened input/output
        #
        # TODO(synk): base NASModule defines no candidate ops (forward is `pass`);
        # these simple elementwise candidates stand in for subclass op sets.
        x = x_ref[...].astype(compute_dtype)
        # Scalar folds stay in f32 (SMEM/sreg are 32-bit); splat + vector-cast
        # once per tile so the per-element VPU/EUP work runs in compute_dtype
        # (bf16 on v6e/v7x, f32 on v5e / f32 inputs).
        w_lin = jnp.broadcast_to(w_ref[0] + 2.0 * w_ref[3], x.shape).astype(compute_dtype)
        w_relu = jnp.broadcast_to(w_ref[1], x.shape).astype(compute_dtype)
        w_tanh = jnp.broadcast_to(w_ref[2], x.shape).astype(compute_dtype)
        out = x * w_lin + w_relu * jnp.maximum(x, 0) + w_tanh * jnp.tanh(x)
        o_ref[...] = out.astype(o_ref.dtype)

    return mixed_op_kernel


def _device_kind() -> str:
    try:
        return jax.devices()[0].device_kind.lower()
    except Exception:
        return ""


def _tile_budget_bytes(kind: str) -> int:
    # Keep 4 x tile (2 in-bufs + 2 out-bufs, double-buffered) under each
    # generation's default scoped VMEM with headroom.
    if "v5 lite" in kind or "v5e" in kind:
        return 3 * 1024 * 1024      # 16 MiB default scoped VMEM
    if "v6" in kind:
        return 6 * 1024 * 1024      # 32 MiB default scoped VMEM, 128 MiB physical
    return 4 * 1024 * 1024          # v7x (64 MiB physical) and everything else


def _min_sublane(dtype) -> int:
    # sublane packing: 8 rows for 32-bit, 16 for bf16, 32 for int8/fp8
    return max(8, 32 // jnp.dtype(dtype).itemsize)


def _pick_lane_width(total: int):
    # Largest multiple of 128 (<= 4096) dividing `total`, preferring one that
    # leaves >= 8 rows so sublanes stay full. None if total % 128 != 0.
    best_any = None
    best = None
    k = 128
    cap = min(total, 4096)
    while k <= cap:
        if total % k == 0:
            best_any = k
            if (total // k) >= 8:
                best = k
        k += 128
    return best if best is not None else best_any


def _choose_tm(rows: int, lane_k: int, dtype, budget_bytes: int) -> int:
    sub = _min_sublane(dtype)
    row_bytes = lane_k * jnp.dtype(dtype).itemsize
    max_rows = max(1, budget_bytes // max(1, row_bytes))
    if rows <= max_rows:
        if rows >= 2 * sub:
            # Emit >= 2 blocks so a multi-TC part ("parallel" axis) can shard rows.
            half = ((rows + 1) // 2 + sub - 1) // sub * sub
            return min(rows, half)
        return rows  # single full-extent block (always a legal block shape)
    tm = (max_rows // sub) * sub
    return max(sub, tm)


def nas_mixed_forward(x_nchw: jax.Array, alpha: jax.Array) -> jax.Array:
    """x_nchw: (B, C, H, W); alpha: (N_OPS,) f32 -> same shape/dtype as x_nchw."""
    shape = x_nchw.shape
    dtype = x_nchw.dtype
    total = 1
    for d in shape:
        total *= int(d)

    kind = _device_kind()
    bf16_native = ("v6" in kind) or ("v7" in kind) or ("7x" in kind)
    compute_dtype = dtype if (dtype == jnp.bfloat16 and bf16_native) else jnp.float32

    # Lane-dense flattening independent of NCHW; elementwise op => any
    # contiguous reshape is semantically free. Fall back to (B*C, H*W) when the
    # element count is not a multiple of 128 (full-extent lane dim is legal).
    lane_k = _pick_lane_width(total)
    if lane_k is None:
        rows, lane_k = shape[0] * shape[1], shape[2] * shape[3]
    else:
        rows = total // lane_k
    x2d = x_nchw.reshape(rows, lane_k)

    # Hoisted: softmax over the 4 arch params, done once in plain JAX -> SMEM.
    w = jax.nn.softmax(alpha.astype(jnp.float32))

    tm = _choose_tm(rows, lane_k, dtype, _tile_budget_bytes(kind))
    grid = (pl.cdiv(rows, tm),)  # ragged last block handled by Pallas masking

    out2d = pl.pallas_call(
        _make_mixed_op_kernel(compute_dtype),
        out_shape=jax.ShapeDtypeStruct((rows, lane_k), dtype),
        grid_spec=pltpu.PrefetchScalarGridSpec(
            num_scalar_prefetch=1,                       # w -> SMEM scalars
            grid=grid,
            in_specs=[pl.BlockSpec((tm, lane_k), lambda i, w_ref: (i, 0))],
            out_specs=pl.BlockSpec((tm, lane_k), lambda i, w_ref: (i, 0)),
        ),
        compiler_params=pltpu.CompilerParams(
            dimension_semantics=("parallel",)),          # shard rows over TCs (v7x)
    )(w, x2d)

    return out2d.reshape(shape)


if __name__ == "__main__":
    key = jax.random.PRNGKey(0)
    k_alpha, k_x = jax.random.split(key)

    # NASModule.add_param: param = 0.001 * randn(params_shape)
    init_ratio = 0.001
    alpha = init_ratio * jax.random.normal(k_alpha, (N_OPS,), dtype=jnp.float32)

    # Small NCHW input consistent with a conv-style NAS cell.
    x = jax.random.normal(k_x, (2, 4, 16, 16), dtype=jnp.float32)

    out = nas_mixed_forward(x, alpha)
    jax.block_until_ready(out)

    # Pure-JAX reference check of the mixed-op semantics.
    w = jax.nn.softmax(alpha)
    ref = (w[0] * x + w[1] * jax.nn.relu(x) + w[2] * jnp.tanh(x) + w[3] * (2.0 * x))
    assert out.shape == (2, 4, 16, 16)
    assert out.dtype == x.dtype
    assert jnp.allclose(out, ref, atol=1e-5, rtol=1e-5)

    # bf16 I/O path (halves HBM traffic; bf16-native compute on v6e/v7x).
    out_bf16 = nas_mixed_forward(x.astype(jnp.bfloat16), alpha)
    jax.block_until_ready(out_bf16)
    assert out_bf16.dtype == jnp.bfloat16
    assert jnp.allclose(out_bf16.astype(jnp.float32), ref, atol=5e-2, rtol=5e-2)

    print("KERNEL_OK")
</pallas_src>

<mosaic_0001>
module attributes {stable_mosaic.version = 11 : i64} {
  func.func @mixed_op_kernel(%arg0: i32, %arg1: memref<4xf32, #tpu.memory_space<smem>>, %arg2: memref<8x256xf32, #tpu.memory_space<vmem>>, %arg3: memref<8x256xf32, #tpu.memory_space<vmem>>) attributes {dimension_semantics = [#tpu.dimension_semantics<parallel>], iteration_bounds = array<i64: 1>, scalar_prefetch = 1 : i64, scratch_operands = 0 : i64, tpu.core_type = #tpu.core_type<tc>, window_params = [{transform_indices = @transform_0, window_bounds = array<i64: 8, 256>}, {transform_indices = @transform_1, window_bounds = array<i64: 8, 256>}]} {
    %c0 = arith.constant 0 : index
    %c0_0 = arith.constant 0 : index
    %0 = vector.load %arg2[%c0, %c0_0] : memref<8x256xf32, #tpu.memory_space<vmem>>, vector<8x256xf32>
    %c0_1 = arith.constant 0 : index
    %1 = memref.load %arg1[%c0_1] : memref<4xf32, #tpu.memory_space<smem>>
    %c3 = arith.constant 3 : index
    %2 = memref.load %arg1[%c3] : memref<4xf32, #tpu.memory_space<smem>>
    %cst = arith.constant 2.000000e+00 : f32
    %3 = arith.mulf %cst, %2 : f32
    %4 = arith.addf %1, %3 : f32
    %5 = vector.broadcast %4 : f32 to vector<8x256xf32>
    %c1 = arith.constant 1 : index
    %6 = memref.load %arg1[%c1] : memref<4xf32, #tpu.memory_space<smem>>
    %7 = vector.broadcast %6 : f32 to vector<8x256xf32>
    %c2 = arith.constant 2 : index
    %8 = memref.load %arg1[%c2] : memref<4xf32, #tpu.memory_space<smem>>
    %9 = vector.broadcast %8 : f32 to vector<8x256xf32>
    %10 = arith.mulf %0, %5 : vector<8x256xf32>
    %cst_2 = arith.constant 0.000000e+00 : f32
    %11 = vector.broadcast %cst_2 : f32 to vector<8x256xf32>
    %12 = arith.maximumf %0, %11 : vector<8x256xf32>
    %13 = arith.mulf %7, %12 : vector<8x256xf32>
    %14 = arith.addf %10, %13 : vector<8x256xf32>
    %15 = math.tanh %0 : vector<8x256xf32>
    %16 = arith.mulf %9, %15 : vector<8x256xf32>
    %17 = arith.addf %14, %16 : vector<8x256xf32>
    %c0_3 = arith.constant 0 : index
    %c0_4 = arith.constant 0 : index
    %18 = vector.load %arg3[%c0_3, %c0_4] : memref<8x256xf32, #tpu.memory_space<vmem>>, vector<8x256xf32>
    tpu.vector_store %arg3[%c0_3, %c0_4], %17 {strides = array<i32>} : memref<8x256xf32, #tpu.memory_space<vmem>>, vector<8x256xf32>,
    return
  }
  func.func @transform_0(%arg0: i32, %arg1: memref<4xf32, #tpu.memory_space<smem>>) -> (i32, i32) {
    %c0_i32 = arith.constant 0 : i32
    %c0_i32_0 = arith.constant 0 : i32
    return %arg0, %c0_i32 : i32, i32
  }
  func.func @transform_1(%arg0: i32, %arg1: memref<4xf32, #tpu.memory_space<smem>>) -> (i32, i32) {
    %c0_i32 = arith.constant 0 : i32
    %c0_i32_0 = arith.constant 0 : i32
    return %arg0, %c0_i32 : i32, i32
  }
}

</mosaic_0001>

<llo_original>
// kernel: tpu_custom_call.1
$region0: #{tpu_custom_call.1}
  #allocation0 [shape = 'u32[]', space=smem, size = 0x4, offset = 0x4, fixed_abs, tag = 'smem constant byte address 0x4 - core index']
  #allocation1 [shape = 'u32[144,128]{1,0:T(1,128)}', space=vmem, size = 0x12000, scoped, tag = 'internal scratch']
  #allocation2 [shape = 's32[1]{0}', space=sflag, size = 0x4, scoped, tag = 'scoped memory for tpu_custom_call.1']
  #allocation3 [shape = 'u8[512]{0}', space=smem, size = 0x200, scoped, tag = 'prefetched SMEM operand 0']
  %s0 = inlined_call_operand.hbm [shape: f32[4], index: 0, kind: input, shape index: {}]
  %s1 = inlined_call_operand.hbm [shape: f32[8,256], index: 1, kind: input, shape index: {}]
  %s2 = inlined_call_operand.hbm [shape: f32[8,256], index: 2, kind: output, shape index: {}]
  %s3 = sld [smem:[#allocation0]]
  $region18: #{tpu_custom_call.1} parent=0
    _
  %s5 = ssub.s32 1, %s3
  %s6 = scalar_select 0, %s5, %s3
  %8 = dma.hbm_to_smem %s0, 16, [#allocation3], [#allocation2]
  %9 = dma.done [#allocation2], 16
  %10 = sfence
  $region1: #{tpu_custom_call.1} parent=0
    #allocation4 [shape = 'u8[8192]{0}', space=vmem, size = 0x2000, scoped, tag = 'input window, operand 1, single buffered']
    #allocation5 [shape = 's32[1]{0}', space=sflag, size = 0x4, scoped, tag = 'scoped memory for tpu_custom_call.1']
    #allocation6 [shape = 's32[1]{0}', space=sflag, size = 0x4, scoped, tag = 'scoped memory for tpu_custom_call.1']
    #allocation7 [shape = 'u8[8192]{0}', space=vmem, size = 0x2000, scoped, tag = 'output window, operand 0, single buffered']
    %11 = vsyncpa [#allocation5], 0
    %12 = vsyncpa [#allocation6], 0
    // Predicated region
    $region2: #{tpu_custom_call.1} parent=1 // pred_check
      _
    $region3: #{tpu_custom_call.1} parent=1 // pred_check_branch
      %14 = sbr.rel (0) target = $region5
    $region4: #{tpu_custom_call.1} parent=1 // pred_region
      %s16 = ssub.s32 256, 256
      %17 = vsyncadd [#allocation5], %s16
      %s19 = sshll.u32 [#allocation4], 4
      %s20 = int_to_ptr.vmem [resolvable:$true] %s19
      %22 = dma.hbm_to_vmem [thread:$0]  %s1, 256, %s20, [#allocation5]
    $region5: #{tpu_custom_call.1} parent=1 // pred_fallthru
      _
    // Predicated region
    $region6: #{tpu_custom_call.1} parent=1 // pred_check
      _
    $region7: #{tpu_custom_call.1} parent=1 // pred_check_branch
      %24 = sbr.rel (0) target = $region9
    $region8: #{tpu_custom_call.1} parent=1 // pred_region
      %25 = dma.done [#allocation5], 256
    $region9: #{tpu_custom_call.1} parent=1 // pred_fallthru
      _
    %v26 = vld [vmem:[#allocation4] sm:$0xff]
    %v27 = vld [vmem:[#allocation4 + $0x8] sm:$0xff]
    %s28 = sld [smem:[#allocation3]]
    %s29 = sld [smem:[#allocation3 + $0x3]]
    %s30 = smul.f32 %s29, 2.0
    %s31 = sadd.f32 %s28, %s30
    %v32 = vstv %s31
    %s33 = sld [smem:[#allocation3 + $0x1]]
    %v34 = vstv %s33
    %s35 = sld [smem:[#allocation3 + $0x2]]
    %v36 = vstv %s35
    %v37 = vmul.f32 %v26, %v32
    %v38 = vmul.f32 %v27, %v32
    %v39 = vmax.f32 %v26, 0.0
    %v40 = vmax.f32 %v27, 0.0
    %v41 = vmul.f32 %v34, %v39
    %v42 = vmul.f32 %v34, %v40
    %v43 = vadd.f32 %v37, %v41
    %v44 = vadd.f32 %v38, %v42
    %v45 = vtanh.pop %v26
    %v46 = vtanh.pop %v27
    %v47 = vmul.f32 %v36, %v45
    %v48 = vmul.f32 %v36, %v46
    %v49 = vadd.f32 %v43, %v47
    %v50 = vadd.f32 %v44, %v48
    %51 = vst [vmem:[#allocation7] sm:$0xff] %v49
    %52 = vst [vmem:[#allocation7 + $0x8] sm:$0xff] %v50
    // Predicated region
    $region10: #{tpu_custom_call.1} parent=1 // pred_check
      _
    $region11: #{tpu_custom_call.1} parent=1 // pred_check_branch
      %54 = sbr.rel (0) target = $region13
    $region12: #{tpu_custom_call.1} parent=1 // pred_region
      %s56 = ssub.s32 256, 256
      %57 = vsyncadd [#allocation6], %s56
      %s59 = sshll.u32 [#allocation7], 4
      %s60 = int_to_ptr.vmem [resolvable:$true] %s59
      %62 = dma.vmem_to_hbm [thread:$0]  %s60, 256, %s2, [#allocation6]
    $region13: #{tpu_custom_call.1} parent=1 // pred_fallthru
      _
    // Predicated region
    $region14: #{tpu_custom_call.1} parent=1 // pred_check
      _
    $region15: #{tpu_custom_call.1} parent=1 // pred_check_branch
      %64 = sbr.rel (0) target = $region17
    $region16: #{tpu_custom_call.1} parent=1 // pred_region
      %65 = dma.done [#allocation6], 256
    $region17: #{tpu_custom_call.1} parent=1 // pred_fallthru
      _
    %66 = vsyncpa [#allocation5], 1
    %67 = vsyncpa [#allocation6], 1

</llo_original>
